<compile_context>
chip_gen: v7x
topology: tpu7x:2x2x1
jax: 0.10.0
libtpu: 0.0.40
codegen_flags: <defaults>
</compile_context>

<pallas_src>
import functools

import jax
import jax.numpy as jnp
from jax.experimental import pallas as pl
from jax.experimental.pallas import tpu as pltpu


SMOOTHING_FACTOR = 0.1  # deterministic "parameter" from __init__

_LANES = 128
_MIN_REBALANCE_BLOCK_BYTES = 1 << 20   # keep rebalanced blocks >= ~1 MiB


def _device_config():
    """Return (num_tensorcores_per_chip, target_block_bytes_per_buffer)."""
    kind = ""
    try:
        kind = (jax.devices()[0].device_kind or "").lower()
    except Exception:
        pass
    if "v7" in kind:
        # 2 TCs, 64 MiB VMEM: 8 MiB blocks -> 4x buffering ~= 34 MiB scoped.
        return 2, 8 * 1024 * 1024
    if "lite" in kind or "v5e" in kind or "v6e" in kind or "v6" in kind:
        # 1 TC, 128 MiB VMEM: bigger blocks amortize the ~0.35 us/step overhead.
        return 1, 12 * 1024 * 1024
    if "v4" in kind or "v5" in kind:
        # v4 / v5p megacore: 2 TCs, plenty of VMEM.
        return 2, 12 * 1024 * 1024
    # Unknown / future chip: assume 2 cores and the tighter VMEM budget.
    return 2, 8 * 1024 * 1024


def _smooth_relu_kernel(x_ref, o_ref, *, smoothing_factor):
    x = x_ref[...].astype(jnp.float32)
    y = 0.5 * (x + jnp.sqrt(x * x + jnp.float32(smoothing_factor)))
    o_ref[...] = y.astype(o_ref.dtype)


def _smooth_relu_slab(x2d, smoothing_factor):
    """Run the kernel over a lane-dense (rows, 128) slab."""
    rows, lanes = x2d.shape
    itemsize = x2d.dtype.itemsize
    bytes_per_row = lanes * itemsize

    # Dtype-aware sublane rounding: 8 rows f32, 16 bf16, 32 int8/fp8 keep
    # packed tiles whole and stores unmasked.
    sub = max(8, 32 // itemsize)

    num_cores, target_block_bytes = _device_config()

    target_rows = max(sub, (target_block_bytes // bytes_per_row) // sub * sub)
    block_rows = rows if rows <= target_rows else target_rows
    num_blocks = pl.cdiv(rows, block_rows)

    # 2-TensorCore chips: keep the "parallel" grid axis balanced and deep
    # enough.  For small grids (< 8 blocks) pick an even number of near-equal
    # blocks (>= 3-4 steps/core once there is >= ~8 MiB of data) so neither
    # core gets a multiple of the other's HBM traffic and the pipeline can
    # overlap DMA of block i+1 with compute of i and writeback of i-1.
    if num_cores > 1 and rows > sub and num_blocks < 8:
        total_bytes = rows * bytes_per_row
        desired = min(8, max(2, total_bytes // _MIN_REBALANCE_BLOCK_BYTES))
        desired = max(2, desired - (desired % 2))      # even split across TCs
        block_rows = pl.cdiv(pl.cdiv(rows, desired), sub) * sub
        num_blocks = pl.cdiv(rows, block_rows)

    block_bytes = block_rows * bytes_per_row
    # in + out, each double-buffered, plus headroom; 32 MiB floor also lifts
    # v5e's 16 MiB scoped default.  (<= ~34 MiB on v7x with 8 MiB blocks.)
    vmem_limit = max(4 * block_bytes + (2 << 20), 32 << 20)

    n_elems = rows * lanes
    cost = pl.CostEstimate(
        flops=4 * n_elems,                       # mul, add, add, mul
        transcendentals=n_elems,                 # sqrt (EUP)
        bytes_accessed=2 * n_elems * itemsize,   # read + write
    )

    # smoothing_factor is a fixed per-module constant, so baking it in is the
    # right analog of the PyTorch module; pass it as an SMEM scalar instead if
    # it ever has to vary at runtime without recompiling.
    kernel = functools.partial(
        _smooth_relu_kernel, smoothing_factor=float(smoothing_factor)
    )

    return pl.pallas_call(
        kernel,
        out_shape=jax.ShapeDtypeStruct((rows, lanes), x2d.dtype),
        grid_spec=pltpu.PrefetchScalarGridSpec(
            num_scalar_prefetch=0,
            grid=(num_blocks,),
            in_specs=[pl.BlockSpec((block_rows, lanes), lambda i: (i, 0))],
            out_specs=pl.BlockSpec((block_rows, lanes), lambda i: (i, 0)),
        ),
        compiler_params=pltpu.CompilerParams(
            dimension_semantics=("parallel",),
            vmem_limit_bytes=int(vmem_limit),
        ),
        cost_estimate=cost,
    )(x2d)


def smooth_relu(x: jax.Array, smoothing_factor: float = SMOOTHING_FACTOR) -> jax.Array:
    """Elementwise SmoothReLU via a Pallas TPU kernel (any input shape)."""
    orig_shape = x.shape
    n = x.size
    if n == 0:
        return x

    x_flat = jnp.ravel(x)
    n_tail = n % _LANES
    n_main = n - n_tail

    parts = []
    if n_main:
        main = x_flat if n_tail == 0 else x_flat[:n_main]
        x2d = main.reshape(n_main // _LANES, _LANES)
        parts.append(_smooth_relu_slab(x2d, smoothing_factor).reshape(-1))
    if n_tail:
        # <128-element ragged tail: negligible work, done in plain jnp so the
        # kernel path never pays a full-tensor pad/slice HBM pass.
        # TODO(synk): fold the tail into the kernel with a masked pltpu.store
        # if the ragged path ever shows up hot.
        t = x_flat[n_main:].astype(jnp.float32)
        tail = 0.5 * (t + jnp.sqrt(t * t + jnp.float32(smoothing_factor)))
        parts.append(tail.astype(x.dtype))

    out_flat = parts[0] if len(parts) == 1 else jnp.concatenate(parts)
    return out_flat.reshape(orig_shape)


if __name__ == "__main__":
    key = jax.random.PRNGKey(0)
    # Small NCHW-like input consistent with a conv-style module: (2, 4, 16, 16)
    x = jax.random.normal(key, (2, 4, 16, 16), dtype=jnp.float32)

    y = smooth_relu(x, SMOOTHING_FACTOR)
    y = jax.block_until_ready(y)

    # Reference check in plain JAX.
    y_ref = 0.5 * (x + jnp.sqrt(x * x + SMOOTHING_FACTOR))
    assert y.shape == x.shape and y.dtype == x.dtype
    assert jnp.allclose(y, y_ref, atol=1e-6, rtol=1e-6)

    print("KERNEL_OK")
</pallas_src>

<mosaic_0001>
module attributes {stable_mosaic.version = 11 : i64} {
  func.func @_smooth_relu_kernel(%arg0: i32, %arg1: memref<8x128xf32, #tpu.memory_space<vmem>>, %arg2: memref<8x128xf32, #tpu.memory_space<vmem>>) attributes {dimension_semantics = [#tpu.dimension_semantics<parallel>], iteration_bounds = array<i64: 2>, scalar_prefetch = 0 : i64, scratch_operands = 0 : i64, tpu.core_type = #tpu.core_type<tc>, window_params = [{transform_indices = @transform_0, window_bounds = array<i64: 8, 128>}, {transform_indices = @transform_1, window_bounds = array<i64: 8, 128>}]} {
    %c0 = arith.constant 0 : index
    %c0_0 = arith.constant 0 : index
    %0 = vector.load %arg1[%c0, %c0_0] : memref<8x128xf32, #tpu.memory_space<vmem>>, vector<8x128xf32>
    %1 = arith.mulf %0, %0 : vector<8x128xf32>
    %cst = arith.constant 1.000000e-01 : f32
    %2 = vector.broadcast %cst : f32 to vector<8x128xf32>
    %3 = arith.addf %1, %2 : vector<8x128xf32>
    %4 = math.sqrt %3 : vector<8x128xf32>
    %5 = arith.addf %0, %4 : vector<8x128xf32>
    %cst_1 = arith.constant 5.000000e-01 : f32
    %6 = vector.broadcast %cst_1 : f32 to vector<8x128xf32>
    %7 = arith.mulf %6, %5 : vector<8x128xf32>
    %c0_2 = arith.constant 0 : index
    %c0_3 = arith.constant 0 : index
    %8 = vector.load %arg2[%c0_2, %c0_3] : memref<8x128xf32, #tpu.memory_space<vmem>>, vector<8x128xf32>
    tpu.vector_store %arg2[%c0_2, %c0_3], %7 {strides = array<i32>} : memref<8x128xf32, #tpu.memory_space<vmem>>, vector<8x128xf32>,
    return
  }
  func.func @transform_0(%arg0: i32) -> (i32, i32) {
    %c0_i32 = arith.constant 0 : i32
    %c0_i32_0 = arith.constant 0 : i32
    return %arg0, %c0_i32 : i32, i32
  }
  func.func @transform_1(%arg0: i32) -> (i32, i32) {
    %c0_i32 = arith.constant 0 : i32
    %c0_i32_0 = arith.constant 0 : i32
    return %arg0, %c0_i32 : i32, i32
  }
}

</mosaic_0001>

<llo_original>
// kernel: tpu_custom_call.1
$region0: #{tpu_custom_call.1}
  #allocation0 [shape = 'u32[]', space=smem, size = 0x4, offset = 0x4, fixed_abs, tag = 'smem constant byte address 0x4 - core index']
  #allocation1 [shape = 'u32[144,128]{1,0:T(1,128)}', space=vmem, size = 0x12000, scoped, tag = 'internal scratch']
  %s0 = inlined_call_operand.hbm [shape: f32[16,128], index: 0, kind: input, shape index: {}]
  %s1 = inlined_call_operand.hbm [shape: f32[16,128], index: 1, kind: output, shape index: {}]
  %s2 = sld [smem:[#allocation0]]
  $region41: #{tpu_custom_call.1} parent=0
    _
  %s4 = ssub.s32 1, %s2
  %s5 = scalar_select 0, %s4, %s2
  $region1: #{tpu_custom_call.1} parent=0
    #allocation2 [shape = 'u8[8192]{0}', space=vmem, size = 0x2000, scoped, tag = 'input window, operand 0']
    #allocation3 [shape = 's32[2]{0}', space=sflag, size = 0x8, scoped, tag = 'scoped memory for tpu_custom_call.1']
    #allocation4 [shape = 's32[2]{0}', space=sflag, size = 0x8, scoped, tag = 'scoped memory for tpu_custom_call.1']
    #allocation5 [shape = 'u8[8192]{0}', space=vmem, size = 0x2000, scoped, tag = 'output window, operand 0']
    %6 = vsyncpa [#allocation3], 0
    %s7 = scalar_lea.sflag [#allocation3], 1
    %8 = vsyncpa %s7, 0
    %9 = vsyncpa [#allocation4], 0
    %s10 = scalar_lea.sflag [#allocation4], 1
    %11 = vsyncpa %s10, 0
    loop: start=0, step=1, limit=4
    $region2: #{tpu_custom_call.1} parent=1 // loop_pre_header
      _
    $region3: #{tpu_custom_call.1} parent=1 // loop_header
      %s13 = sphi 0, %s17
      %p14 = scmp.ge.s32.totalorder %s13, 4
      %s23 = sphi 0, %s25
      %s26 = sphi 0, %s23
      %s27 = sphi 0, %s26
      %s43 = sphi 0, %s27
      %s49 = sphi 0, %s51
      %s52 = sphi 0, %s49
      %s53 = sphi 0, %s52
      %s69 = sphi 0, %s53
    $region4: #{tpu_custom_call.1} parent=1 // loop_header_branch
      %16 = sbr.rel (%p14) target = $region8
    $region5: #{tpu_custom_call.1} parent=1 // loop_body
      %s18 = ssub.s32 %s13, 1
      %s19 = ssub.s32 %s13, 2
      %s20 = sadd.s32 %s13, 1
      %s21 = ssub.s32 %s13, %s20
      %p22 = scmp.eq.s32.totalorder %s21, 0
      %s24 = sadd.s32 %s23, 1
      %s25 = scalar_select %p22, %s23, %s24
      %p28 = pneg %p22
      %p29 = scmp.eq.s32.totalorder %s13, 1
      %p30 = por %p28, %p29
      %p31 = scmp.ne.s32.totalorder %s23, %s26
      %p32 = scmp.eq.s32.totalorder %s13, 0
      %p33 = por %p31, %p32
      %p34 = scmp.ne.s32.totalorder %s23, %s26
      %p35 = scmp.eq.s32.totalorder %s18, 1
      %p36 = por %p34, %p35
      %p37 = scmp.ne.s32.totalorder %s26, %s27
      %p38 = scmp.eq.s32.totalorder %s18, 0
      %p39 = por %p37, %p38
      %p40 = scmp.ne.s32.totalorder %s26, %s27
      %p41 = scmp.eq.s32.totalorder %s19, 1
      %p42 = por %p40, %p41
      %p44 = scmp.ne.s32.totalorder %s27, %s43
      %p45 = scmp.eq.s32.totalorder %s19, 0
      %p46 = por %p44, %p45
      %s47 = ssub.s32 %s13, %s20
      %p48 = scmp.eq.s32.totalorder %s47, 0
      %s50 = sadd.s32 %s49, 1
      %s51 = scalar_select %p48, %s49, %s50
      %p54 = pneg %p48
      %p55 = scmp.eq.s32.totalorder %s13, 1
      %p56 = por %p54, %p55
      %p57 = scmp.ne.s32.totalorder %s49, %s52
      %p58 = scmp.eq.s32.totalorder %s13, 0
      %p59 = por %p57, %p58
      %p60 = scmp.ne.s32.totalorder %s49, %s52
      %p61 = scmp.eq.s32.totalorder %s18, 1
      %p62 = por %p60, %p61
      %p63 = scmp.ne.s32.totalorder %s52, %s53
      %p64 = scmp.eq.s32.totalorder %s18, 0
      %p65 = por %p63, %p64
      %p66 = scmp.ne.s32.totalorder %s52, %s53
      %p67 = scmp.eq.s32.totalorder %s19, 1
      %p68 = por %p66, %p67
      %p70 = scmp.ne.s32.totalorder %s53, %s69
      %p71 = scmp.eq.s32.totalorder %s19, 0
      %p72 = por %p70, %p71
      %p73 = scmp.le.s32.totalorder 1, %s13
      %p74 = scmp.lt.s32.totalorder %s13, 3
      %p75 = pnand %p73, %p74
      %p76 = pneg %p75
      // Predicated region
      $region9: #{tpu_custom_call.1} parent=5 // pred_check
        _
      $region10: #{tpu_custom_call.1} parent=5 // pred_check_branch
        %78 = sbr.rel (%p75) target = $region12
      $region11: #{tpu_custom_call.1} parent=5 // pred_region
        %s79 = ssub.s32 %s13, 1
      $region12: #{tpu_custom_call.1} parent=5 // pred_fallthru
        _
      %p80 = scmp.lt.s32.totalorder %s13, 2
      // Predicated region
      $region13: #{tpu_custom_call.1} parent=5 // pred_check
        %p81 = pneg %p80
      $region14: #{tpu_custom_call.1} parent=5 // pred_check_branch
        %83 = sbr.rel (%p81) target = $region16
      $region15: #{tpu_custom_call.1} parent=5 // pred_region
        // Predicated region
        $region17: #{tpu_custom_call.1} parent=15 // pred_check
          %p84 = pneg %p33
        $region18: #{tpu_custom_call.1} parent=15 // pred_check_branch
          %86 = sbr.rel (%p84) target = $region20
        $region19: #{tpu_custom_call.1} parent=15 // pred_region
          %s87 = sand.u32 %s23, 1
          %s88 = scalar_lea.sflag [#allocation3], %s87
          %s89 = sand.u32 %s23, 1
          %s90 = smul.addr %s89, 8
          %s91 = scalar_lea.vmem [#allocation2], %s90
          %s93 = ssub.s32 128, 128
          %94 = vsyncadd %s88, %s93
          %s95 = smul.addr %s13, 128
          %s96 = scalar_lea.hbm %s0, %s95
          %s98 = sshll.u32 %s91, 4
          %s99 = int_to_ptr.vmem [resolvable:$true] %s98
          %101 = dma.hbm_to_vmem [thread:$0]  %s96, 128, %s99, %s88
        $region20: #{tpu_custom_call.1} parent=15 // pred_fallthru
          _
      $region16: #{tpu_custom_call.1} parent=5 // pred_fallthru
        _
      %p102 = scmp.le.s32.totalorder 1, %s13
      %p103 = scmp.lt.s32.totalorder %s13, 3
      %p104 = pnand %p102, %p103
      %p105 = pneg %p104
      // Predicated region
      $region21: #{tpu_custom_call.1} parent=5 // pred_check
        _
      $region22: #{tpu_custom_call.1} parent=5 // pred_check_branch
        %107 = sbr.rel (%p104) target = $region24
      $region23: #{tpu_custom_call.1} parent=5 // pred_region
        %s108 = ssub.s32 %s13, 1
        %s109 = sand.u32 %s26, 1
        %s110 = scalar_lea.sflag [#allocation3], %s109
        %s111 = sand.u32 %s26, 1
        %s112 = smul.addr %s111, 8
        %s113 = scalar_lea.vmem [#allocation2], %s112
        // Predicated region
        $region25: #{tpu_custom_call.1} parent=23 // pred_check
          %p114 = pneg %p39
        $region26: #{tpu_custom_call.1} parent=23 // pred_check_branch
          %116 = sbr.rel (%p114) target = $region28
        $region27: #{tpu_custom_call.1} parent=23 // pred_region
          %117 = dma.done %s110, 128
        $region28: #{tpu_custom_call.1} parent=23 // pred_fallthru
          _
        %s118 = sand.u32 %s26, 1
        %s119 = scalar_lea.sflag [#allocation3], %s118
        %s120 = sand.u32 %s26, 1
        %s121 = smul.addr %s120, 8
        %s122 = scalar_lea.vmem [#allocation2], %s121
        %p123 = pneg %p39
        %p124 = pneg %p36
        %p125 = pneg %p65
        %p126 = pneg %p62
        %s127 = sand.u32 %s52, 1
        %s128 = scalar_lea.sflag [#allocation4], %s127
        %s129 = sand.u32 %s52, 1
        %s130 = smul.addr %s129, 8
        %s131 = scalar_lea.vmem [#allocation5], %s130
        %v132 = vld [vmem:[%s113] sm:$0xff]
        %v133 = vmul.f32 %v132, %v132
        %v134 = vadd.f32 %v133, 0.1
        %v135 = vrsqrt.pop %v134
        %v136 = vmul.f32 %v134, %v135
        %vm137 = vcmp.eq.f32.partialorder %v134, inf
        %v138 = vsel %vm137, %v134, %v136
        %vm139 = vcmp.eq.f32.partialorder %v134, 0.0
        %v140 = vand.u32 %v134, 2147483648
        %v141 = vsel %vm139, %v140, %v138
        %v142 = vadd.f32 %v132, %v141
        %v143 = vmul.f32 %v142, 0.5
        %144 = vst [vmem:[%s131] sm:$0xff] %v143
        %s145 = sand.u32 %s52, 1
        %s146 = scalar_lea.sflag [#allocation4], %s145
        %s147 = sand.u32 %s52, 1
        %s148 = smul.addr %s147, 8
        %s149 = scalar_lea.vmem [#allocation5], %s148
        // Predicated region
        $region29: #{tpu_custom_call.1} parent=23 // pred_check
          %p150 = pneg %p62
        $region30: #{tpu_custom_call.1} parent=23 // pred_check_branch
          %152 = sbr.rel (%p150) target = $region32
        $region31: #{tpu_custom_call.1} parent=23 // pred_region
          %s154 = ssub.s32 128, 128
          %155 = vsyncadd %s146, %s154
          %s156 = smul.addr %s18, 128
          %s157 = scalar_lea.hbm %s1, %s156
          %s159 = sshll.u32 %s149, 4
          %s160 = int_to_ptr.vmem [resolvable:$true] %s159
          %162 = dma.vmem_to_hbm [thread:$0]  %s160, 128, %s157, %s146
        $region32: #{tpu_custom_call.1} parent=23 // pred_fallthru
          _
      $region24: #{tpu_custom_call.1} parent=5 // pred_fallthru
        _
      %p163 = scmp.le.s32.totalorder 2, %s13
      // Predicated region
      $region33: #{tpu_custom_call.1} parent=5 // pred_check
        %p164 = pneg %p163
      $region34: #{tpu_custom_call.1} parent=5 // pred_check_branch
        %166 = sbr.rel (%p164) target = $region36
      $region35: #{tpu_custom_call.1} parent=5 // pred_region
        %s167 = ssub.s32 %s13, 2
        // Predicated region
        $region37: #{tpu_custom_call.1} parent=35 // pred_check
          %p168 = pneg %p68
        $region38: #{tpu_custom_call.1} parent=35 // pred_check_branch
          %170 = sbr.rel (%p168) target = $region40
        $region39: #{tpu_custom_call.1} parent=35 // pred_region
          %s171 = sand.u32 %s53, 1
          %s172 = scalar_lea.sflag [#allocation4], %s171
          %s173 = sand.u32 %s53, 1
          %s174 = smul.addr %s173, 8
          %s175 = scalar_lea.vmem [#allocation5], %s174
          %176 = dma.done %s172, 128
        $region40: #{tpu_custom_call.1} parent=35 // pred_fallthru
          _
      $region36: #{tpu_custom_call.1} parent=5 // pred_fallthru
        _
    $region6: #{tpu_custom_call.1} parent=1 // loop_footer
      %s17 = sadd.s32 1, %s13
    $region7: #{tpu_custom_call.1} parent=1 // loop_footer_branch
      %12 = sbr.rel target = $region3
    $region8: #{tpu_custom_call.1} parent=1 // loop_exit
      _
    %177 = vsyncpa [#allocation3], 1
    %s178 = scalar_lea.sflag [#allocation3], 1
    %179 = vsyncpa %s178, 1
    %180 = vsyncpa [#allocation4], 1
    %s181 = scalar_lea.sflag [#allocation4], 1
    %182 = vsyncpa %s181, 1

</llo_original>
